<compile_context>
chip_gen: v6e
topology: v6e:2x2x1
jax: 0.10.0
libtpu: 0.0.40
codegen_flags: <defaults>
</compile_context>

<pallas_src>
import functools

import jax
import jax.numpy as jnp
from jax.experimental import pallas as pl
from jax.experimental.pallas import tpu as pltpu

_LANE = 128
_BATCH_TILE = 128


def _round_up(x, m):
    return ((x + m - 1) // m) * m


# ----------------------------------------------------------------------------
# Fused 3-layer MLP backbone forward (one block / one grid step):
#   h1 = relu(x @ W1 + b1)     f32 epilogue on the f32 MXU accumulator
#   h2 = relu(h1 @ W2 + b2)
#   out = h2 @ Wc + bc         lane-dense (128-wide) f32 store
# x arrives f32 and is cast to bf16 in-kernel; W* are bf16, biases f32.
# ----------------------------------------------------------------------------
def _backbone_kernel(x_ref, w1_ref, b1_ref, w2_ref, b2_ref, wc_ref, bc_ref,
                     o_ref):
    x = x_ref[...].astype(jnp.bfloat16)                          # [bt, Dp]
    h1 = jnp.dot(x, w1_ref[...], preferred_element_type=jnp.float32)
    h1 = jnp.maximum(h1 + b1_ref[...], 0.0)                      # [bt, Hp] f32
    h2 = jnp.dot(h1.astype(jnp.bfloat16), w2_ref[...],
                 preferred_element_type=jnp.float32)
    h2 = jnp.maximum(h2 + b2_ref[...], 0.0)                      # [bt, Hp] f32
    logits = jnp.dot(h2.astype(jnp.bfloat16), wc_ref[...],
                     preferred_element_type=jnp.float32)
    o_ref[...] = logits + bc_ref[...]                            # [bt, NCp] f32


@functools.partial(jax.jit, static_argnames=("num_classes", "hidden"))
def continual_model_forward(x_nchw, padded_params, *, num_classes, hidden):
    """Forward pass equivalent to ContinualModel.forward -> self.net(x)."""
    w1p, b1p, w2p, b2p, wcp, bcp = padded_params
    B = x_nchw.shape[0]
    Dp, Hp = w1p.shape
    NCp = wcp.shape[1]

    # Flatten NCHW -> [B, C*H*W] (row-major, same as torch x.view(B, -1)).
    # No batch padding, no cast here; kernel tolerates small B directly.
    x_flat = x_nchw.reshape(B, -1)
    D = x_flat.shape[1]
    if D != Dp:  # static trace-time check; no-op when D is already 128-aligned
        x_flat = jnp.pad(x_flat, ((0, 0), (0, Dp - D)))

    # Logical (unpadded) cost so XLA's scheduler isn't over-prioritizing this
    # call by the ~4x padding blow-up.
    flops = 2 * B * (D * hidden + hidden * hidden + hidden * num_classes)
    bytes_accessed = (
        B * D * 4
        + (D * hidden + hidden * hidden + hidden * num_classes) * 2
        + (2 * hidden + num_classes) * 4
        + B * num_classes * 4
    )
    cost = pl.CostEstimate(flops=flops, transcendentals=0,
                           bytes_accessed=bytes_accessed)

    args = (x_flat, w1p, b1p, w2p, b2p, wcp, bcp)

    if B >= 2 * _BATCH_TILE and B % _BATCH_TILE == 0:
        # Batched path: grid over batch tiles. Weight index_maps are constant,
        # so weights load once and stay resident in VMEM across grid steps;
        # "parallel" lets v7x shard the batch tiles across both TensorCores.
        out = pl.pallas_call(
            _backbone_kernel,
            out_shape=jax.ShapeDtypeStruct((B, NCp), jnp.float32),
            grid=(B // _BATCH_TILE,),
            in_specs=[
                pl.BlockSpec((_BATCH_TILE, Dp), lambda i: (i, 0)),
                pl.BlockSpec((Dp, Hp), lambda i: (0, 0)),
                pl.BlockSpec((1, Hp), lambda i: (0, 0)),
                pl.BlockSpec((Hp, Hp), lambda i: (0, 0)),
                pl.BlockSpec((1, Hp), lambda i: (0, 0)),
                pl.BlockSpec((Hp, NCp), lambda i: (0, 0)),
                pl.BlockSpec((1, NCp), lambda i: (0, 0)),
            ],
            out_specs=pl.BlockSpec((_BATCH_TILE, NCp), lambda i: (i, 0)),
            compiler_params=pltpu.CompilerParams(
                dimension_semantics=("parallel",)),
            cost_estimate=cost,
        )(*args)
    else:
        # Small-batch path: no grid; whole working set (~300 KiB) lives in VMEM
        # on every generation, so pipelining would only add per-step overhead.
        vmem = pl.BlockSpec(memory_space=pltpu.MemorySpace.VMEM)
        out = pl.pallas_call(
            _backbone_kernel,
            out_shape=jax.ShapeDtypeStruct((B, NCp), jnp.float32),
            in_specs=[vmem] * 7,
            out_specs=vmem,
            cost_estimate=cost,
        )(*args)

    # Only the class-lane slice remains; there are no padded batch rows.
    # TODO(synk): if weights are frozen across many forwards, a cross-call
    # prefetch (P10) could keep them VMEM-resident between pallas_calls.
    return out[:, :num_classes]


def init_backbone_params(key, in_features, hidden, num_classes):
    """Deterministic init mimicking torch.nn.Linear default U[-1/sqrt(fan_in), +]."""
    ks = jax.random.split(key, 6)

    def lin(kw, kb, fan_in, fan_out):
        bound = 1.0 / jnp.sqrt(jnp.float32(fan_in))
        w = jax.random.uniform(kw, (fan_in, fan_out), jnp.float32, -bound, bound)
        b = jax.random.uniform(kb, (1, fan_out), jnp.float32, -bound, bound)
        return w, b

    w1, b1 = lin(ks[0], ks[1], in_features, hidden)
    w2, b2 = lin(ks[2], ks[3], hidden, hidden)
    wc, bc = lin(ks[4], ks[5], hidden, num_classes)   # classifier head
    return (w1, b1, w2, b2, wc, bc)


def pad_params_for_kernel(params):
    """Zero-pad params to MXU/vreg-friendly shapes, weights in bf16.

    Zero padding preserves semantics exactly: padded hidden units are
    relu(0 + 0) = 0 and contribute nothing downstream; padded class lanes are
    0 and get sliced off by the wrapper.
    """
    w1, b1, w2, b2, wc, bc = params
    D, Hl = w1.shape
    NC = wc.shape[1]
    Dp = _round_up(D, _LANE)
    Hp = _round_up(max(Hl, _LANE), _LANE)
    NCp = _round_up(max(NC, _LANE), _LANE)

    bf16 = jnp.bfloat16
    w1p = jnp.zeros((Dp, Hp), bf16).at[:D, :Hl].set(w1.astype(bf16))
    b1p = jnp.zeros((1, Hp), jnp.float32).at[:, :Hl].set(b1)
    w2p = jnp.zeros((Hp, Hp), bf16).at[:Hl, :Hl].set(w2.astype(bf16))
    b2p = jnp.zeros((1, Hp), jnp.float32).at[:, :Hl].set(b2)
    wcp = jnp.zeros((Hp, NCp), bf16).at[:Hl, :NC].set(wc.astype(bf16))
    bcp = jnp.zeros((1, NCp), jnp.float32).at[:, :NC].set(bc)
    return (w1p, b1p, w2p, b2p, wcp, bcp)


# Pure-JAX reference mirroring the kernel's bf16-input / f32-accumulate math
# (same quantization points, unpadded params).
def _ref_forward_bf16(x_nchw, params):
    w1, b1, w2, b2, wc, bc = params
    x = x_nchw.reshape(x_nchw.shape[0], -1).astype(jnp.bfloat16)
    h1 = jnp.dot(x, w1.astype(jnp.bfloat16), preferred_element_type=jnp.float32)
    h1 = jnp.maximum(h1 + b1, 0.0)
    h2 = jnp.dot(h1.astype(jnp.bfloat16), w2.astype(jnp.bfloat16),
                 preferred_element_type=jnp.float32)
    h2 = jnp.maximum(h2 + b2, 0.0)
    logits = jnp.dot(h2.astype(jnp.bfloat16), wc.astype(jnp.bfloat16),
                     preferred_element_type=jnp.float32)
    return logits + bc


if __name__ == "__main__":
    # Synthetic continual-learning setup: n_tasks * cpt classes.
    n_tasks, cpt = 5, 2
    num_classes = n_tasks * cpt                     # net.num_classes
    B, C, H, W = 2, 4, 16, 16                       # small NCHW batch
    hidden = 32
    in_features = C * H * W                         # 1024

    key = jax.random.PRNGKey(0)
    kx, kp, kb = jax.random.split(key, 3)
    x = jax.random.normal(kx, (B, C, H, W), jnp.float32)

    params = init_backbone_params(kp, in_features, hidden, num_classes)
    padded_params = pad_params_for_kernel(params)

    # TODO(synk): optimizer setup / data-aug transforms / wandb logging /
    # observe() training loop / reset_classifier in ContinualModel are
    # host-side utilities with no kernel analogue.

    # Small-batch (no-grid) path.
    out = continual_model_forward(x, padded_params,
                                  num_classes=num_classes, hidden=hidden)
    out = jax.block_until_ready(out)
    ref = _ref_forward_bf16(x, params)
    assert out.shape == (B, num_classes)
    assert jnp.allclose(out, ref, atol=1e-2, rtol=1e-2)

    # Batched (gridded, megacore-parallel) path — amortizes weight DMA and
    # launch overhead across 128-row tiles.
    Bb = 256
    xb = jax.random.normal(kb, (Bb, C, H, W), jnp.float32)
    out_b = continual_model_forward(xb, padded_params,
                                    num_classes=num_classes, hidden=hidden)
    out_b = jax.block_until_ready(out_b)
    ref_b = _ref_forward_bf16(xb, params)
    assert out_b.shape == (Bb, num_classes)
    assert jnp.allclose(out_b, ref_b, atol=1e-2, rtol=1e-2)

    print("KERNEL_OK")
</pallas_src>

<mosaic_0001>
module attributes {stable_mosaic.version = 11 : i64} {
  func.func @_backbone_kernel(%arg0: memref<2x1024xf32, #tpu.memory_space<vmem>>, %arg1: memref<1024x128xbf16, #tpu.memory_space<vmem>>, %arg2: memref<1x128xf32, #tpu.memory_space<vmem>>, %arg3: memref<128x128xbf16, #tpu.memory_space<vmem>>, %arg4: memref<1x128xf32, #tpu.memory_space<vmem>>, %arg5: memref<128x128xbf16, #tpu.memory_space<vmem>>, %arg6: memref<1x128xf32, #tpu.memory_space<vmem>>, %arg7: memref<2x128xf32, #tpu.memory_space<vmem>>) attributes {dimension_semantics = [], scalar_prefetch = 0 : i64, scratch_operands = 0 : i64, tpu.core_type = #tpu.core_type<tc>} {
    %c0 = arith.constant 0 : index
    %c0_0 = arith.constant 0 : index
    %0 = vector.load %arg0[%c0, %c0_0] : memref<2x1024xf32, #tpu.memory_space<vmem>>, vector<2x1024xf32>
    %1 = arith.truncf %0 : vector<2x1024xf32> to vector<2x1024xbf16>
    %c0_1 = arith.constant 0 : index
    %c0_2 = arith.constant 0 : index
    %2 = vector.load %arg1[%c0_1, %c0_2] : memref<1024x128xbf16, #tpu.memory_space<vmem>>, vector<1024x128xbf16>
    %cst = arith.constant dense<0.000000e+00> : vector<2x128xf32>
    %3 = tpu.matmul %1, %2, %cst {dimension_numbers = #tpu.dot_dimension_numbers<[1], [0], [0], [1], [0, 0, 1, 1], [], []>} : vector<2x1024xbf16>, vector<1024x128xbf16>, vector<2x128xf32> -> vector<2x128xf32>
    %c0_3 = arith.constant 0 : index
    %c0_4 = arith.constant 0 : index
    %4 = vector.load %arg2[%c0_3, %c0_4] : memref<1x128xf32, #tpu.memory_space<vmem>>, vector<1x128xf32>
    %5 = vector.broadcast %4 : vector<1x128xf32> to vector<2x128xf32>
    %6 = arith.addf %3, %5 : vector<2x128xf32>
    %cst_5 = arith.constant 0.000000e+00 : f32
    %7 = vector.broadcast %cst_5 : f32 to vector<2x128xf32>
    %8 = arith.maximumf %6, %7 : vector<2x128xf32>
    %9 = arith.truncf %8 : vector<2x128xf32> to vector<2x128xbf16>
    %c0_6 = arith.constant 0 : index
    %c0_7 = arith.constant 0 : index
    %10 = vector.load %arg3[%c0_6, %c0_7] : memref<128x128xbf16, #tpu.memory_space<vmem>>, vector<128x128xbf16>
    %cst_8 = arith.constant dense<0.000000e+00> : vector<2x128xf32>
    %11 = tpu.matmul %9, %10, %cst_8 {dimension_numbers = #tpu.dot_dimension_numbers<[1], [0], [0], [1], [0, 0, 1, 1], [], []>} : vector<2x128xbf16>, vector<128x128xbf16>, vector<2x128xf32> -> vector<2x128xf32>
    %c0_9 = arith.constant 0 : index
    %c0_10 = arith.constant 0 : index
    %12 = vector.load %arg4[%c0_9, %c0_10] : memref<1x128xf32, #tpu.memory_space<vmem>>, vector<1x128xf32>
    %13 = vector.broadcast %12 : vector<1x128xf32> to vector<2x128xf32>
    %14 = arith.addf %11, %13 : vector<2x128xf32>
    %cst_11 = arith.constant 0.000000e+00 : f32
    %15 = vector.broadcast %cst_11 : f32 to vector<2x128xf32>
    %16 = arith.maximumf %14, %15 : vector<2x128xf32>
    %17 = arith.truncf %16 : vector<2x128xf32> to vector<2x128xbf16>
    %c0_12 = arith.constant 0 : index
    %c0_13 = arith.constant 0 : index
    %18 = vector.load %arg5[%c0_12, %c0_13] : memref<128x128xbf16, #tpu.memory_space<vmem>>, vector<128x128xbf16>
    %cst_14 = arith.constant dense<0.000000e+00> : vector<2x128xf32>
    %19 = tpu.matmul %17, %18, %cst_14 {dimension_numbers = #tpu.dot_dimension_numbers<[1], [0], [0], [1], [0, 0, 1, 1], [], []>} : vector<2x128xbf16>, vector<128x128xbf16>, vector<2x128xf32> -> vector<2x128xf32>
    %c0_15 = arith.constant 0 : index
    %c0_16 = arith.constant 0 : index
    %20 = vector.load %arg6[%c0_15, %c0_16] : memref<1x128xf32, #tpu.memory_space<vmem>>, vector<1x128xf32>
    %21 = vector.broadcast %20 : vector<1x128xf32> to vector<2x128xf32>
    %22 = arith.addf %19, %21 : vector<2x128xf32>
    %c0_17 = arith.constant 0 : index
    %c0_18 = arith.constant 0 : index
    %23 = vector.load %arg7[%c0_17, %c0_18] : memref<2x128xf32, #tpu.memory_space<vmem>>, vector<2x128xf32>
    tpu.vector_store %arg7[%c0_17, %c0_18], %22 {strides = array<i32>} : memref<2x128xf32, #tpu.memory_space<vmem>>, vector<2x128xf32>,
    return
  }
}

</mosaic_0001>

<llo_original>
// kernel: continual_model_forward.1
$region0: #{continual_model_forward.1}
  #allocation0 [shape = 'u32[]', space=smem, size = 0x4, offset = 0x4, fixed_abs, tag = 'smem constant byte address 0x4 - core index']
  #allocation1 [shape = 'u32[144,128]{1,0:T(1,128)}', space=vmem, size = 0x12000, scoped, tag = 'internal scratch']
  %s0 = inlined_call_operand.vmem [shape: f32[2,1024], index: 0, kind: input, shape index: {}]
  %s1 = inlined_call_operand.hbm [shape: bf16[1024,128], index: 1, kind: input, shape index: {}]
  %s2 = inlined_call_operand.vmem [shape: f32[1,128], index: 2, kind: input, shape index: {}]
  %s3 = inlined_call_operand.vmem [shape: bf16[128,128], index: 3, kind: input, shape index: {}]
  %s4 = inlined_call_operand.vmem [shape: f32[1,128], index: 4, kind: input, shape index: {}]
  %s5 = inlined_call_operand.vmem [shape: bf16[128,128], index: 5, kind: input, shape index: {}]
  %s6 = inlined_call_operand.vmem [shape: f32[1,128], index: 6, kind: input, shape index: {}]
  %s7 = inlined_call_operand.hbm [shape: f32[2,128], index: 7, kind: output, shape index: {}]
  %s8 = sld [smem:[#allocation0]]
  $region42: #{continual_model_forward.1} parent=0
    _
  %s10 = ssub.s32 1, %s8
  %s11 = scalar_select 0, %s10, %s8
  $region1: #{continual_model_forward.1} parent=0
    #allocation2 [shape = 'u8[262144]{0}', space=vmem, size = 0x40000, scoped, tag = 'input window, operand 1, single buffered']
    #allocation3 [shape = 's32[1]{0}', space=sflag, size = 0x4, scoped, tag = 'scoped memory for continual_model_forward.1']
    #allocation4 [shape = 's32[1]{0}', space=sflag, size = 0x4, scoped, tag = 'scoped memory for continual_model_forward.1']
    #allocation5 [shape = 'u8[1024]{0}', space=vmem, size = 0x400, scoped, tag = 'output window, operand 0, single buffered']
    %12 = vsyncpa [#allocation3], 0
    %13 = vsyncpa [#allocation4], 0
    // Predicated region
    $region2: #{continual_model_forward.1} parent=1 // pred_check
      _
    $region3: #{continual_model_forward.1} parent=1 // pred_check_branch
      %15 = sbr.rel (0) target = $region5
    $region4: #{continual_model_forward.1} parent=1 // pred_region
      _
    $region5: #{continual_model_forward.1} parent=1 // pred_fallthru
      _
    // Predicated region
    $region6: #{continual_model_forward.1} parent=1 // pred_check
      _
    $region7: #{continual_model_forward.1} parent=1 // pred_check_branch
      %17 = sbr.rel (0) target = $region9
    $region8: #{continual_model_forward.1} parent=1 // pred_region
      %s19 = ssub.s32 8192, 8192
      %20 = vsyncadd [#allocation3], %s19
      %s21 = sshll.u32 [#allocation2], 4
      %s22 = int_to_ptr.vmem [resolvable:$true] %s21
      %27 = dma.hbm_to_vmem [thread:$0]  %s1, 8192, %s22, [#allocation3], 64, 64, 4
    $region9: #{continual_model_forward.1} parent=1 // pred_fallthru
      _
    // Predicated region
    $region10: #{continual_model_forward.1} parent=1 // pred_check
      _
    $region11: #{continual_model_forward.1} parent=1 // pred_check_branch
      %29 = sbr.rel (0) target = $region13
    $region12: #{continual_model_forward.1} parent=1 // pred_region
      _
    $region13: #{continual_model_forward.1} parent=1 // pred_fallthru
      _
    // Predicated region
    $region14: #{continual_model_forward.1} parent=1 // pred_check
      _
    $region15: #{continual_model_forward.1} parent=1 // pred_check_branch
      %31 = sbr.rel (0) target = $region17
    $region16: #{continual_model_forward.1} parent=1 // pred_region
      _
    $region17: #{continual_model_forward.1} parent=1 // pred_fallthru
      _
    // Predicated region
    $region18: #{continual_model_forward.1} parent=1 // pred_check
      _
    $region19: #{continual_model_forward.1} parent=1 // pred_check_branch
      %33 = sbr.rel (0) target = $region21
    $region20: #{continual_model_forward.1} parent=1 // pred_region
      _
    $region21: #{continual_model_forward.1} parent=1 // pred_fallthru
      _
    // Predicated region
    $region22: #{continual_model_forward.1} parent=1 // pred_check
      _
    $region23: #{continual_model_forward.1} parent=1 // pred_check_branch
      %35 = sbr.rel (0) target = $region25
    $region24: #{continual_model_forward.1} parent=1 // pred_region
      _
    $region25: #{continual_model_forward.1} parent=1 // pred_fallthru
      _
    // Predicated region
    $region26: #{continual_model_forward.1} parent=1 // pred_check
      _
    $region27: #{continual_model_forward.1} parent=1 // pred_check_branch
      %37 = sbr.rel (0) target = $region29
    $region28: #{continual_model_forward.1} parent=1 // pred_region
      _
    $region29: #{continual_model_forward.1} parent=1 // pred_fallthru
      _
    // Predicated region
    $region30: #{continual_model_forward.1} parent=1 // pred_check
      _
    $region31: #{continual_model_forward.1} parent=1 // pred_check_branch
      %39 = sbr.rel (0) target = $region33
    $region32: #{continual_model_forward.1} parent=1 // pred_region
      %40 = dma.done [#allocation3], 8192
    $region33: #{continual_model_forward.1} parent=1 // pred_fallthru
      _
    %v42 = vld [vmem:[%s0] sm:$0xff]
    %v43 = vld [vmem:[%s0 + $0x8] sm:$0xff]
    %v46 = vcombine.high %v42, %v42
    %v48 = vunpack.c.l.s4 1983009808
    %v49 = vunpack.c.0.s8 %v48
    %v50 = vlaneseq
    %v51 = vshrl.u32 %v50, 7
    %v52 = vsub.s32 %v49, %v51
    %v53 = vrot.slane %v42, %v52
    %v55 = vunpack.c.l.s4 1983009808
    %v56 = vunpack.c.0.s8 %v55
    %v57 = vlaneseq
    %v58 = vshrl.u32 %v57, 7
    %v59 = vsub.s32 %v56, %v58
    %v60 = vrot.slane %v46, %v59
    %v61 = vcombine.high %v53, %v53
    %v62 = vcombine.high %v60, %v60
    %v63 = vcombine.high %v43, %v43
    %v65 = vunpack.c.l.s4 1983009808
    %v66 = vunpack.c.0.s8 %v65
    %v67 = vlaneseq
    %v68 = vshrl.u32 %v67, 7
    %v69 = vsub.s32 %v66, %v68
    %v70 = vrot.slane %v43, %v69
    %v72 = vunpack.c.l.s4 1983009808
    %v73 = vunpack.c.0.s8 %v72
    %v74 = vlaneseq
    %v75 = vshrl.u32 %v74, 7
    %v76 = vsub.s32 %v73, %v75
    %v77 = vrot.slane %v63, %v76
    %v78 = vcombine.high %v70, %v70
    %v79 = vcombine.high %v77, %v77
    %v88 = vpack.c.bf16 %v53, %v53
    %v89 = vpack.c.bf16 %v61, %v61
    %v90 = vpack.c.bf16 %v60, %v60
    %v91 = vpack.c.bf16 %v62, %v62
    %v92 = vpack.c.bf16 %v70, %v70
    %v93 = vpack.c.bf16 %v78, %v78
    %v94 = vpack.c.bf16 %v77, %v77
    %v95 = vpack.c.bf16 %v79, %v79
    %v96 = vld [vmem:[#allocation2] sm:$0xf]
    %v97 = vld [vmem:[#allocation2 + $0x4] sm:$0xf]
    %v98 = vld [vmem:[#allocation2 + $0x8] sm:$0xf]
    %v99 = vld [vmem:[#allocation2 + $0xc] sm:$0xf]
    %v100 = vld [vmem:[#allocation2 + $0x10] sm:$0xf]
    %v101 = vld [vmem:[#allocation2 + $0x14] sm:$0xf]
    %v102 = vld [vmem:[#allocation2 + $0x18] sm:$0xf]
    %v103 = vld [vmem:[#allocation2 + $0x1c] sm:$0xf]
    %v104 = vld [vmem:[#allocation2 + $0x20] sm:$0xf]
    %v105 = vld [vmem:[#allocation2 + $0x24] sm:$0xf]
    %v106 = vld [vmem:[#allocation2 + $0x28] sm:$0xf]
    %v107 = vld [vmem:[#allocation2 + $0x2c] sm:$0xf]
    %v108 = vld [vmem:[#allocation2 + $0x30] sm:$0xf]
    %v109 = vld [vmem:[#allocation2 + $0x34] sm:$0xf]
    %v110 = vld [vmem:[#allocation2 + $0x38] sm:$0xf]
    %v111 = vld [vmem:[#allocation2 + $0x3c] sm:$0xf]
    %v112 = vld [vmem:[#allocation2 + $0x40] sm:$0xf]
    %v113 = vld [vmem:[#allocation2 + $0x44] sm:$0xf]
    %v114 = vld [vmem:[#allocation2 + $0x48] sm:$0xf]
    %v115 = vld [vmem:[#allocation2 + $0x4c] sm:$0xf]
    %v116 = vld [vmem:[#allocation2 + $0x50] sm:$0xf]
    %v117 = vld [vmem:[#allocation2 + $0x54] sm:$0xf]
    %v118 = vld [vmem:[#allocation2 + $0x58] sm:$0xf]
    %v119 = vld [vmem:[#allocation2 + $0x5c] sm:$0xf]
    %v120 = vld [vmem:[#allocation2 + $0x60] sm:$0xf]
    %v121 = vld [vmem:[#allocation2 + $0x64] sm:$0xf]
    %v122 = vld [vmem:[#allocation2 + $0x68] sm:$0xf]
    %v123 = vld [vmem:[#allocation2 + $0x6c] sm:$0xf]
    %v124 = vld [vmem:[#allocation2 + $0x70] sm:$0xf]
    %v125 = vld [vmem:[#allocation2 + $0x74] sm:$0xf]
    %v126 = vld [vmem:[#allocation2 + $0x78] sm:$0xf]
    %v127 = vld [vmem:[#allocation2 + $0x7c] sm:$0xf]
    %v128 = vld [vmem:[#allocation2 + $0x80] sm:$0xf]
    %v129 = vld [vmem:[#allocation2 + $0x84] sm:$0xf]
    %v130 = vld [vmem:[#allocation2 + $0x88] sm:$0xf]
    %v131 = vld [vmem:[#allocation2 + $0x8c] sm:$0xf]
    %v132 = vld [vmem:[#allocation2 + $0x90] sm:$0xf]
    %v133 = vld [vmem:[#allocation2 + $0x94] sm:$0xf]
    %v134 = vld [vmem:[#allocation2 + $0x98] sm:$0xf]
    %v135 = vld [vmem:[#allocation2 + $0x9c] sm:$0xf]
    %v136 = vld [vmem:[#allocation2 + $0xa0] sm:$0xf]
    %v137 = vld [vmem:[#allocation2 + $0xa4] sm:$0xf]
    %v138 = vld [vmem:[#allocation2 + $0xa8] sm:$0xf]
    %v139 = vld [vmem:[#allocation2 + $0xac] sm:$0xf]
    %v140 = vld [vmem:[#allocation2 + $0xb0] sm:$0xf]
    %v141 = vld [vmem:[#allocation2 + $0xb4] sm:$0xf]
    %v142 = vld [vmem:[#allocation2 + $0xb8] sm:$0xf]
    %v143 = vld [vmem:[#allocation2 + $0xbc] sm:$0xf]
    %v144 = vld [vmem:[#allocation2 + $0xc0] sm:$0xf]
    %v145 = vld [vmem:[#allocation2 + $0xc4] sm:$0xf]
    %v146 = vld [vmem:[#allocation2 + $0xc8] sm:$0xf]
    %v147 = vld [vmem:[#allocation2 + $0xcc] sm:$0xf]
    %v148 = vld [vmem:[#allocation2 + $0xd0] sm:$0xf]
    %v149 = vld [vmem:[#allocation2 + $0xd4] sm:$0xf]
    %v150 = vld [vmem:[#allocation2 + $0xd8] sm:$0xf]
    %v151 = vld [vmem:[#allocation2 + $0xdc] sm:$0xf]
    %v152 = vld [vmem:[#allocation2 + $0xe0] sm:$0xf]
    %v153 = vld [vmem:[#allocation2 + $0xe4] sm:$0xf]
    %v154 = vld [vmem:[#allocation2 + $0xe8] sm:$0xf]
    %v155 = vld [vmem:[#allocation2 + $0xec] sm:$0xf]
    %v156 = vld [vmem:[#allocation2 + $0xf0] sm:$0xf]
    %v157 = vld [vmem:[#allocation2 + $0xf4] sm:$0xf]
    %v158 = vld [vmem:[#allocation2 + $0xf8] sm:$0xf]
    %v159 = vld [vmem:[#allocation2 + $0xfc] sm:$0xf]
    %v160 = vld [vmem:[#allocation2 + $0x100] sm:$0xf]
    %v161 = vld [vmem:[#allocation2 + $0x104] sm:$0xf]
    %v162 = vld [vmem:[#allocation2 + $0x108] sm:$0xf]
    %v163 = vld [vmem:[#allocation2 + $0x10c] sm:$0xf]
    %v164 = vld [vmem:[#allocation2 + $0x110] sm:$0xf]
    %v165 = vld [vmem:[#allocation2 + $0x114] sm:$0xf]
    %v166 = vld [vmem:[#allocation2 + $0x118] sm:$0xf]
    %v167 = vld [vmem:[#allocation2 + $0x11c] sm:$0xf]
    %v168 = vld [vmem:[#allocation2 + $0x120] sm:$0xf]
    %v169 = vld [vmem:[#allocation2 + $0x124] sm:$0xf]
    %v170 = vld [vmem:[#allocation2 + $0x128] sm:$0xf]
    %v171 = vld [vmem:[#allocation2 + $0x12c] sm:$0xf]
    %v172 = vld [vmem:[#allocation2 + $0x130] sm:$0xf]
    %v173 = vld [vmem:[#allocation2 + $0x134] sm:$0xf]
    %v174 = vld [vmem:[#allocation2 + $0x138] sm:$0xf]
    %v175 = vld [vmem:[#allocation2 + $0x13c] sm:$0xf]
    %v176 = vld [vmem:[#allocation2 + $0x140] sm:$0xf]
    %v177 = vld [vmem:[#allocation2 + $0x144] sm:$0xf]
    %v178 = vld [vmem:[#allocation2 + $0x148] sm:$0xf]
    %v179 = vld [vmem:[#allocation2 + $0x14c] sm:$0xf]
    %v180 = vld [vmem:[#allocation2 + $0x150] sm:$0xf]
    %v181 = vld [vmem:[#allocation2 + $0x154] sm:$0xf]
    %v182 = vld [vmem:[#allocation2 + $0x158] sm:$0xf]
    %v183 = vld [vmem:[#allocation2 + $0x15c] sm:$0xf]
    %v184 = vld [vmem:[#allocation2 + $0x160] sm:$0xf]
    %v185 = vld [vmem:[#allocation2 + $0x164] sm:$0xf]
    %v186 = vld [vmem:[#allocation2 + $0x168] sm:$0xf]
    %v187 = vld [vmem:[#allocation2 + $0x16c] sm:$0xf]
    %v188 = vld [vmem:[#allocation2 + $0x170] sm:$0xf]
    %v189 = vld [vmem:[#allocation2 + $0x174] sm:$0xf]
    %v190 = vld [vmem:[#allocation2 + $0x178] sm:$0xf]
    %v191 = vld [vmem:[#allocation2 + $0x17c] sm:$0xf]
    %v192 = vld [vmem:[#allocation2 + $0x180] sm:$0xf]
    %v193 = vld [vmem:[#allocation2 + $0x184] sm:$0xf]
    %v194 = vld [vmem:[#allocation2 + $0x188] sm:$0xf]
    %v195 = vld [vmem:[#allocation2 + $0x18c] sm:$0xf]
    %v196 = vld [vmem:[#allocation2 + $0x190] sm:$0xf]
    %v197 = vld [vmem:[#allocation2 + $0x194] sm:$0xf]
    %v198 = vld [vmem:[#allocation2 + $0x198] sm:$0xf]
    %v199 = vld [vmem:[#allocation2 + $0x19c] sm:$0xf]
    %v200 = vld [vmem:[#allocation2 + $0x1a0] sm:$0xf]
    %v201 = vld [vmem:[#allocation2 + $0x1a4] sm:$0xf]
    %v202 = vld [vmem:[#allocation2 + $0x1a8] sm:$0xf]
    %v203 = vld [vmem:[#allocation2 + $0x1ac] sm:$0xf]
    %v204 = vld [vmem:[#allocation2 + $0x1b0] sm:$0xf]
    %v205 = vld [vmem:[#allocation2 + $0x1b4] sm:$0xf]
    %v206 = vld [vmem:[#allocation2 + $0x1b8] sm:$0xf]
    %v207 = vld [vmem:[#allocation2 + $0x1bc] sm:$0xf]
    %v208 = vld [vmem:[#allocation2 + $0x1c0] sm:$0xf]
    %v209 = vld [vmem:[#allocation2 + $0x1c4] sm:$0xf]
    %v210 = vld [vmem:[#allocation2 + $0x1c8] sm:$0xf]
    %v211 = vld [vmem:[#allocation2 + $0x1cc] sm:$0xf]
    %v212 = vld [vmem:[#allocation2 + $0x1d0] sm:$0xf]
    %v213 = vld [vmem:[#allocation2 + $0x1d4] sm:$0xf]
    %v214 = vld [vmem:[#allocation2 + $0x1d8] sm:$0xf]
    %v215 = vld [vmem:[#allocation2 + $0x1dc] sm:$0xf]
    %v216 = vld [vmem:[#allocation2 + $0x1e0] sm:$0xf]
    %v217 = vld [vmem:[#allocation2 + $0x1e4] sm:$0xf]
    %v218 = vld [vmem:[#allocation2 + $0x1e8] sm:$0xf]
    %v219 = vld [vmem:[#allocation2 + $0x1ec] sm:$0xf]
    %v220 = vld [vmem:[#allocation2 + $0x1f0] sm:$0xf]
    %v221 = vld [vmem:[#allocation2 + $0x1f4] sm:$0xf]
    %v222 = vld [vmem:[#allocation2 + $0x1f8] sm:$0xf]
    %v223 = vld [vmem:[#allocation2 + $0x1fc] sm:$0xf]
    %v224 = vld [vmem:[%s2] sm:$0x1]
    %v226 = vlaneseq
    %v227 = vshrl.u32 %v226, 7
    %v228 = vsub.s32 0, %v227
    %v229 = vrot.slane %v224, %v228
    %v359 = vunpack.c.l.b16 %v96
    %v360 = vunpack.c.l.b16 %v97
    %v361 = vunpack.c.l.b16 %v98
    %v362 = vunpack.c.l.b16 %v99
    %v363 = vunpack.c.l.b16 %v100
    %v364 = vunpack.c.l.b16 %v101
    %v365 = vunpack.c.l.b16 %v102
    %v366 = vunpack.c.l.b16 %v103
    %v367 = vunpack.c.l.b16 %v104
    %v368 = vunpack.c.l.b16 %v105
    %v369 = vunpack.c.l.b16 %v106
    %v370 = vunpack.c.l.b16 %v107
    %v371 = vunpack.c.l.b16 %v108
    %v372 = vunpack.c.l.b16 %v109
    %v373 = vunpack.c.l.b16 %v110
    %v374 = vunpack.c.l.b16 %v111
    %v375 = vunpack.c.l.b16 %v112
    %v376 = vunpack.c.l.b16 %v113
    %v377 = vunpack.c.l.b16 %v114
    %v378 = vunpack.c.l.b16 %v115
    %v379 = vunpack.c.l.b16 %v116
    %v380 = vunpack.c.l.b16 %v117
    %v381 = vunpack.c.l.b16 %v118
    %v382 = vunpack.c.l.b16 %v119
    %v383 = vunpack.c.l.b16 %v120
    %v384 = vunpack.c.l.b16 %v121
    %v385 = vunpack.c.l.b16 %v122
    %v386 = vunpack.c.l.b16 %v123
    %v387 = vunpack.c.l.b16 %v124
    %v388 = vunpack.c.l.b16 %v125
    %v389 = vunpack.c.l.b16 %v126
    %v390 = vunpack.c.l.b16 %v127
    %v391 = vunpack.c.l.b16 %v128
    %v392 = vunpack.c.l.b16 %v129
    %v393 = vunpack.c.l.b16 %v130
    %v394 = vunpack.c.l.b16 %v131
    %v395 = vunpack.c.l.b16 %v132
    %v396 = vunpack.c.l.b16 %v133
    %v397 = vunpack.c.l.b16 %v134
    %v398 = vunpack.c.l.b16 %v135
    %v399 = vunpack.c.l.b16 %v136
    %v400 = vunpack.c.l.b16 %v137
    %v401 = vunpack.c.l.b16 %v138
    %v402 = vunpack.c.l.b16 %v139
    %v403 = vunpack.c.l.b16 %v140
    %v404 = vunpack.c.l.b16 %v141
    %v405 = vunpack.c.l.b16 %v142
    %v406 = vunpack.c.l.b16 %v143
    %v407 = vunpack.c.l.b16 %v144
    %v408 = vunpack.c.l.b16 %v145
    %v409 = vunpack.c.l.b16 %v146
    %v410 = vunpack.c.l.b16 %v147
    %v411 = vunpack.c.l.b16 %v148
    %v412 = vunpack.c.l.b16 %v149
    %v413 = vunpack.c.l.b16 %v150
    %v414 = vunpack.c.l.b16 %v151
    %v415 = vunpack.c.l.b16 %v152
    %v416 = vunpack.c.l.b16 %v153
    %v417 = vunpack.c.l.b16 %v154
    %v418 = vunpack.c.l.b16 %v155
    %v419 = vunpack.c.l.b16 %v156
    %v420 = vunpack.c.l.b16 %v157
    %v421 = vunpack.c.l.b16 %v158
    %v422 = vunpack.c.l.b16 %v159
    %v423 = vunpack.c.l.b16 %v160
    %v424 = vunpack.c.l.b16 %v161
    %v425 = vunpack.c.l.b16 %v162
    %v426 = vunpack.c.l.b16 %v163
    %v427 = vunpack.c.l.b16 %v164
    %v428 = vunpack.c.l.b16 %v165
    %v429 = vunpack.c.l.b16 %v166
    %v430 = vunpack.c.l.b16 %v167
    %v431 = vunpack.c.l.b16 %v168
    %v432 = vunpack.c.l.b16 %v169
    %v433 = vunpack.c.l.b16 %v170
    %v434 = vunpack.c.l.b16 %v171
    %v435 = vunpack.c.l.b16 %v172
    %v436 = vunpack.c.l.b16 %v173
    %v437 = vunpack.c.l.b16 %v174
    %v438 = vunpack.c.l.b16 %v175
    %v439 = vunpack.c.l.b16 %v176
    %v440 = vunpack.c.l.b16 %v177
    %v441 = vunpack.c.l.b16 %v178
    %v442 = vunpack.c.l.b16 %v179
    %v443 = vunpack.c.l.b16 %v180
    %v444 = vunpack.c.l.b16 %v181
    %v445 = vunpack.c.l.b16 %v182
    %v446 = vunpack.c.l.b16 %v183
    %v447 = vunpack.c.l.b16 %v184
    %v448 = vunpack.c.l.b16 %v185
    %v449 = vunpack.c.l.b16 %v186
    %v450 = vunpack.c.l.b16 %v187
    %v451 = vunpack.c.l.b16 %v188
    %v452 = vunpack.c.l.b16 %v189
    %v453 = vunpack.c.l.b16 %v190
    %v454 = vunpack.c.l.b16 %v191
    %v455 = vunpack.c.l.b16 %v192
    %v456 = vunpack.c.l.b16 %v193
    %v457 = vunpack.c.l.b16 %v194
    %v458 = vunpack.c.l.b16 %v195
    %v459 = vunpack.c.l.b16 %v196
    %v460 = vunpack.c.l.b16 %v197
    %v461 = vunpack.c.l.b16 %v198
    %v462 = vunpack.c.l.b16 %v199
    %v463 = vunpack.c.l.b16 %v200
    %v464 = vunpack.c.l.b16 %v201
    %v465 = vunpack.c.l.b16 %v202
    %v466 = vunpack.c.l.b16 %v203
    %v467 = vunpack.c.l.b16 %v204
    %v468 = vunpack.c.l.b16 %v205
    %v469 = vunpack.c.l.b16 %v206
    %v470 = vunpack.c.l.b16 %v207
    %v471 = vunpack.c.l.b16 %v208
    %v472 = vunpack.c.l.b16 %v209
    %v473 = vunpack.c.l.b16 %v210
    %v474 = vunpack.c.l.b16 %v211
    %v475 = vunpack.c.l.b16 %v212
    %v476 = vunpack.c.l.b16 %v213
    %v477 = vunpack.c.l.b16 %v214
    %v478 = vunpack.c.l.b16 %v215
    %v479 = vunpack.c.l.b16 %v216
    %v480 = vunpack.c.l.b16 %v217
    %v481 = vunpack.c.l.b16 %v218
    %v482 = vunpack.c.l.b16 %v219
    %v483 = vunpack.c.l.b16 %v220
    %v484 = vunpack.c.l.b16 %v221
    %v485 = vunpack.c.l.b16 %v222
    %v486 = vunpack.c.l.b16 %v223
    %v487 = vpack.c.b16 %v360, %v359
    %v488 = vpack.c.b16 %v362, %v361
    %v489 = vpack.c.b16 %v364, %v363
    %v490 = vpack.c.b16 %v366, %v365
    %v491 = vpack.c.b16 %v368, %v367
    %v492 = vpack.c.b16 %v370, %v369
    %v493 = vpack.c.b16 %v372, %v371
    %v494 = vpack.c.b16 %v374, %v373
    %v495 = vpack.c.b16 %v376, %v375
    %v496 = vpack.c.b16 %v378, %v377
    %v497 = vpack.c.b16 %v380, %v379
    %v498 = vpack.c.b16 %v382, %v381
    %v499 = vpack.c.b16 %v384, %v383
    %v500 = vpack.c.b16 %v386, %v385
    %v501 = vpack.c.b16 %v388, %v387
    %v502 = vpack.c.b16 %v390, %v389
    %v503 = vpack.c.b16 %v392, %v391
    %v504 = vpack.c.b16 %v394, %v393
    %v505 = vpack.c.b16 %v396, %v395
    %v506 = vpack.c.b16 %v398, %v397
    %v507 = vpack.c.b16 %v400, %v399
    %v508 = vpack.c.b16 %v402, %v401
    %v509 = vpack.c.b16 %v404, %v403
    %v510 = vpack.c.b16 %v406, %v405
    %v511 = vpack.c.b16 %v408, %v407
    %v512 = vpack.c.b16 %v410, %v409
    %v513 = vpack.c.b16 %v412, %v411
    %v514 = vpack.c.b16 %v414, %v413
    %v515 = vpack.c.b16 %v416, %v415
    %v516 = vpack.c.b16 %v418, %v417
    %v517 = vpack.c.b16 %v420, %v419
    %v518 = vpack.c.b16 %v422, %v421
    %v519 = vpack.c.b16 %v424, %v423
    %v520 = vpack.c.b16 %v426, %v425
    %v521 = vpack.c.b16 %v428, %v427
    %v522 = vpack.c.b16 %v430, %v429
    %v523 = vpack.c.b16 %v432, %v431
    %v524 = vpack.c.b16 %v434, %v433
    %v525 = vpack.c.b16 %v436, %v435
    %v526 = vpack.c.b16 %v438, %v437
    %v527 = vpack.c.b16 %v440, %v439
    %v528 = vpack.c.b16 %v442, %v441
    %v529 = vpack.c.b16 %v444, %v443
    %v530 = vpack.c.b16 %v446, %v445
    %v531 = vpack.c.b16 %v448, %v447
    %v532 = vpack.c.b16 %v450, %v449
    %v533 = vpack.c.b16 %v452, %v451
    %v534 = vpack.c.b16 %v454, %v453
    %v535 = vpack.c.b16 %v456, %v455
    %v536 = vpack.c.b16 %v458, %v457
    %v537 = vpack.c.b16 %v460, %v459
    %v538 = vpack.c.b16 %v462, %v461
    %v539 = vpack.c.b16 %v464, %v463
    %v540 = vpack.c.b16 %v466, %v465
    %v541 = vpack.c.b16 %v468, %v467
    %v542 = vpack.c.b16 %v470, %v469
    %v543 = vpack.c.b16 %v472, %v471
    %v544 = vpack.c.b16 %v474, %v473
    %v545 = vpack.c.b16 %v476, %v475
    %v546 = vpack.c.b16 %v478, %v477
    %v547 = vpack.c.b16 %v480, %v479
    %v548 = vpack.c.b16 %v482, %v481
    %v549 = vpack.c.b16 %v484, %v483
    %v550 = vpack.c.b16 %v486, %v485
    %615 = vmatprep.subr.bf16.mxu0 0
    %616 = vmatpush1.bf16.msra.mxu0 %v494
    %617 = vmatprep.subr.bf16.mxu0 0
    %618 = vmatpush1.bf16.msra.mxu0 %v493
    %619 = vmatprep.subr.bf16.mxu0 0
    %620 = vmatpush1.bf16.msra.mxu0 %v492
    %621 = vmatprep.subr.bf16.mxu0 0
    %622 = vmatpush1.bf16.msra.mxu0 %v491
    %623 = vmatprep.subr.bf16.mxu0 0
    %624 = vmatpush1.bf16.msra.mxu0 %v490
    %625 = vmatprep.subr.bf16.mxu0 0
    %626 = vmatpush1.bf16.msra.mxu0 %v489
    %627 = vmatprep.subr.bf16.mxu0 0
    %628 = vmatpush1.bf16.msra.mxu0 %v488
    %629 = vmatprep.subr.bf16.mxu0 0
    %630 = vmatpush1.bf16.msra.mxu0 %v487
    %631 = vmatprep.subr.bf16.mxu0 0
    %632 = vmatpush2.bf16.msra.mxu0 %v502
    %633 = vmatprep.subr.bf16.mxu0 0
    %634 = vmatpush2.bf16.msra.mxu0 %v501
    %635 = vmatprep.subr.bf16.mxu0 0
    %636 = vmatpush2.bf16.msra.mxu0 %v500
    %637 = vmatprep.subr.bf16.mxu0 0
    %638 = vmatpush2.bf16.msra.mxu0 %v499
    %639 = vmatprep.subr.bf16.mxu0 0
    %640 = vmatpush2.bf16.msra.mxu0 %v498
    %641 = vmatprep.subr.bf16.mxu0 0
    %642 = vmatpush2.bf16.msra.mxu0 %v497
    %643 = vmatprep.subr.bf16.mxu0 0
    %644 = vmatpush2.bf16.msra.mxu0 %v496
    %645 = vmatprep.subr.bf16.mxu0 0
    %646 = vmatpush2.bf16.msra.mxu0 %v495
    %647 = vmatprep.mubr.bf16.mxu0 %v89
    %648 = vmatmul.mubr.bf16.gmra.mxu0 %v88
    %v649 = vpop.f32.mrf.mxu0
    %v650 = vadd.f32 %v229, %v649
    %v651 = vpop.f32.mrf.mxu0
    %v652 = vpop.f32.mrf.mxu0
    %v653 = vpop.f32.mrf.mxu0
    %654 = vdwg.mxu0
    %655 = vmatprep.subr.bf16.mxu0 0
    %656 = vmatpush1.bf16.msra.mxu0 %v510
    %657 = vmatprep.subr.bf16.mxu0 0
    %658 = vmatpush1.bf16.msra.mxu0 %v509
    %659 = vmatprep.subr.bf16.mxu0 0
    %660 = vmatpush1.bf16.msra.mxu0 %v508
    %661 = vmatprep.subr.bf16.mxu0 0
    %662 = vmatpush1.bf16.msra.mxu0 %v507
    %663 = vmatprep.subr.bf16.mxu0 0
    %664 = vmatpush1.bf16.msra.mxu0 %v506
    %665 = vmatprep.subr.bf16.mxu0 0
    %666 = vmatpush1.bf16.msra.mxu0 %v505
    %667 = vmatprep.subr.bf16.mxu0 0
    %668 = vmatpush1.bf16.msra.mxu0 %v504
    %669 = vmatprep.subr.bf16.mxu0 0
    %670 = vmatpush1.bf16.msra.mxu0 %v503
    %671 = vmatprep.subr.bf16.mxu0 0
    %672 = vmatpush2.bf16.msra.mxu0 %v518
    %673 = vmatprep.subr.bf16.mxu0 0
    %674 = vmatpush2.bf16.msra.mxu0 %v517
    %675 = vmatprep.subr.bf16.mxu0 0
    %676 = vmatpush2.bf16.msra.mxu0 %v516
    %677 = vmatprep.subr.bf16.mxu0 0
    %678 = vmatpush2.bf16.msra.mxu0 %v515
    %679 = vmatprep.subr.bf16.mxu0 0
    %680 = vmatpush2.bf16.msra.mxu0 %v514
    %681 = vmatprep.subr.bf16.mxu0 0
    %682 = vmatpush2.bf16.msra.mxu0 %v513
    %683 = vmatprep.subr.bf16.mxu0 0
    %684 = vmatpush2.bf16.msra.mxu0 %v512
    %685 = vmatprep.subr.bf16.mxu0 0
    %686 = vmatpush2.bf16.msra.mxu0 %v511
    %687 = vmatprep.mubr.bf16.mxu0 %v91
    %688 = vmatmul.mubr.bf16.gmra.mxu0 %v90
    %v689 = vpop.f32.mrf.mxu0
    %v690 = vadd.f32 %v650, %v689
    %v691 = vpop.f32.mrf.mxu0
    %v692 = vpop.f32.mrf.mxu0
    %v693 = vpop.f32.mrf.mxu0
    %694 = vdwg.mxu0
    %695 = vmatprep.subr.bf16.mxu0 0
    %696 = vmatpush1.bf16.msra.mxu0 %v526
    %697 = vmatprep.subr.bf16.mxu0 0
    %698 = vmatpush1.bf16.msra.mxu0 %v525
    %699 = vmatprep.subr.bf16.mxu0 0
    %700 = vmatpush1.bf16.msra.mxu0 %v524
    %701 = vmatprep.subr.bf16.mxu0 0
    %702 = vmatpush1.bf16.msra.mxu0 %v523
    %703 = vmatprep.subr.bf16.mxu0 0
    %704 = vmatpush1.bf16.msra.mxu0 %v522
    %705 = vmatprep.subr.bf16.mxu0 0
    %706 = vmatpush1.bf16.msra.mxu0 %v521
    %707 = vmatprep.subr.bf16.mxu0 0
    %708 = vmatpush1.bf16.msra.mxu0 %v520
    %709 = vmatprep.subr.bf16.mxu0 0
    %710 = vmatpush1.bf16.msra.mxu0 %v519
    %711 = vmatprep.subr.bf16.mxu0 0
    %712 = vmatpush2.bf16.msra.mxu0 %v534
    %713 = vmatprep.subr.bf16.mxu0 0
    %714 = vmatpush2.bf16.msra.mxu0 %v533
    %715 = vmatprep.subr.bf16.mxu0 0
    %716 = vmatpush2.bf16.msra.mxu0 %v532
    %717 = vmatprep.subr.bf16.mxu0 0
    %718 = vmatpush2.bf16.msra.mxu0 %v531
    %719 = vmatprep.subr.bf16.mxu0 0
    %720 = vmatpush2.bf16.msra.mxu0 %v530
    %721 = vmatprep.subr.bf16.mxu0 0
    %722 = vmatpush2.bf16.msra.mxu0 %v529
    %723 = vmatprep.subr.bf16.mxu0 0
    %724 = vmatpush2.bf16.msra.mxu0 %v528
    %725 = vmatprep.subr.bf16.mxu0 0
    %726 = vmatpush2.bf16.msra.mxu0 %v527
    %727 = vmatprep.mubr.bf16.mxu0 %v93
    %728 = vmatmul.mubr.bf16.gmra.mxu0 %v92
    %v729 = vpop.f32.mrf.mxu0
    %v730 = vadd.f32 %v690, %v729
    %v731 = vpop.f32.mrf.mxu0
    %v732 = vpop.f32.mrf.mxu0
    %v733 = vpop.f32.mrf.mxu0
    %734 = vdwg.mxu0
    %735 = vmatprep.subr.bf16.mxu0 0
    %736 = vmatpush1.bf16.msra.mxu0 %v542
    %737 = vmatprep.subr.bf16.mxu0 0
    %738 = vmatpush1.bf16.msra.mxu0 %v541
    %739 = vmatprep.subr.bf16.mxu0 0
    %740 = vmatpush1.bf16.msra.mxu0 %v540
    %741 = vmatprep.subr.bf16.mxu0 0
    %742 = vmatpush1.bf16.msra.mxu0 %v539
    %743 = vmatprep.subr.bf16.mxu0 0
    %744 = vmatpush1.bf16.msra.mxu0 %v538
    %745 = vmatprep.subr.bf16.mxu0 0
    %746 = vmatpush1.bf16.msra.mxu0 %v537
    %747 = vmatprep.subr.bf16.mxu0 0
    %748 = vmatpush1.bf16.msra.mxu0 %v536
    %749 = vmatprep.subr.bf16.mxu0 0
    %750 = vmatpush1.bf16.msra.mxu0 %v535
    %751 = vmatprep.subr.bf16.mxu0 0
    %752 = vmatpush2.bf16.msra.mxu0 %v550
    %753 = vmatprep.subr.bf16.mxu0 0
    %754 = vmatpush2.bf16.msra.mxu0 %v549
    %755 = vmatprep.subr.bf16.mxu0 0
    %756 = vmatpush2.bf16.msra.mxu0 %v548
    %757 = vmatprep.subr.bf16.mxu0 0
    %758 = vmatpush2.bf16.msra.mxu0 %v547
    %759 = vmatprep.subr.bf16.mxu0 0
    %760 = vmatpush2.bf16.msra.mxu0 %v546
    %761 = vmatprep.subr.bf16.mxu0 0
    %762 = vmatpush2.bf16.msra.mxu0 %v545
    %763 = vmatprep.subr.bf16.mxu0 0
    %764 = vmatpush2.bf16.msra.mxu0 %v544
    %765 = vmatprep.subr.bf16.mxu0 0
    %766 = vmatpush2.bf16.msra.mxu0 %v543
    %767 = vmatprep.mubr.bf16.mxu0 %v95
    %768 = vmatmul.mubr.bf16.gmra.mxu0 %v94
    %v769 = vpop.f32.mrf.mxu0
    %v770 = vadd.f32 %v730, %v769
    %v771 = vpop.f32.mrf.mxu0
    %v772 = vpop.f32.mrf.mxu0
    %v773 = vpop.f32.mrf.mxu0
    %774 = vdwg.mxu0
    %v775 = vmax.f32 %v770, 0.0
    %v776 = vpack.c.bf16 %v775, %v775
    %v777 = vld [vmem:[%s3] sm:$0xf]
    %v778 = vld [vmem:[%s3 + $0x4] sm:$0xf]
    %v779 = vld [vmem:[%s3 + $0x8] sm:$0xf]
    %v780 = vld [vmem:[%s3 + $0xc] sm:$0xf]
    %v781 = vld [vmem:[%s3 + $0x10] sm:$0xf]
    %v782 = vld [vmem:[%s3 + $0x14] sm:$0xf]
    %v783 = vld [vmem:[%s3 + $0x18] sm:$0xf]
    %v784 = vld [vmem:[%s3 + $0x1c] sm:$0xf]
    %v785 = vld [vmem:[%s3 + $0x20] sm:$0xf]
    %v786 = vld [vmem:[%s3 + $0x24] sm:$0xf]
    %v787 = vld [vmem:[%s3 + $0x28] sm:$0xf]
    %v788 = vld [vmem:[%s3 + $0x2c] sm:$0xf]
    %v789 = vld [vmem:[%s3 + $0x30] sm:$0xf]
    %v790 = vld [vmem:[%s3 + $0x34] sm:$0xf]
    %v791 = vld [vmem:[%s3 + $0x38] sm:$0xf]
    %v792 = vld [vmem:[%s3 + $0x3c] sm:$0xf]
    %v793 = vld [vmem:[%s4] sm:$0x1]
    %v795 = vlaneseq
    %v796 = vshrl.u32 %v795, 7
    %v797 = vsub.s32 0, %v796
    %v798 = vrot.slane %v793, %v797
    %v816 = vunpack.c.l.b16 %v777
    %v817 = vunpack.c.l.b16 %v778
    %v818 = vunpack.c.l.b16 %v779
    %v819 = vunpack.c.l.b16 %v780
    %v820 = vunpack.c.l.b16 %v781
    %v821 = vunpack.c.l.b16 %v782
    %v822 = vunpack.c.l.b16 %v783
    %v823 = vunpack.c.l.b16 %v784
    %v824 = vunpack.c.l.b16 %v785
    %v825 = vunpack.c.l.b16 %v786
    %v826 = vunpack.c.l.b16 %v787
    %v827 = vunpack.c.l.b16 %v788
    %v828 = vunpack.c.l.b16 %v789
    %v829 = vunpack.c.l.b16 %v790
    %v830 = vunpack.c.l.b16 %v791
    %v831 = vunpack.c.l.b16 %v792
    %v832 = vpack.c.b16 %v817, %v816
    %v833 = vpack.c.b16 %v819, %v818
    %v834 = vpack.c.b16 %v821, %v820
    %v835 = vpack.c.b16 %v823, %v822
    %v836 = vpack.c.b16 %v825, %v824
    %v837 = vpack.c.b16 %v827, %v826
    %v838 = vpack.c.b16 %v829, %v828
    %v839 = vpack.c.b16 %v831, %v830
    %848 = vmatprep.subr.bf16.mxu0 0
    %849 = vmatpush1.bf16.msra.mxu0 %v839
    %850 = vmatprep.subr.bf16.mxu0 0
    %851 = vmatpush1.bf16.msra.mxu0 %v838
    %852 = vmatprep.subr.bf16.mxu0 0
    %853 = vmatpush1.bf16.msra.mxu0 %v837
    %854 = vmatprep.subr.bf16.mxu0 0
    %855 = vmatpush1.bf16.msra.mxu0 %v836
    %856 = vmatprep.subr.bf16.mxu0 0
    %857 = vmatpush1.bf16.msra.mxu0 %v835
    %858 = vmatprep.subr.bf16.mxu0 0
    %859 = vmatpush1.bf16.msra.mxu0 %v834
    %860 = vmatprep.subr.bf16.mxu0 0
    %861 = vmatpush1.bf16.msra.mxu0 %v833
    %862 = vmatprep.subr.bf16.mxu0 0
    %863 = vmatpush1.bf16.msra.mxu0 %v832
    %864 = vmatprep.subr.bf16.mxu0 0
    %865 = vmatpush2.bf16.msra.mxu0 0
    %866 = vmatprep.subr.bf16.mxu0 0
    %867 = vmatpush2.bf16.msra.mxu0 0
    %868 = vmatprep.subr.bf16.mxu0 0
    %869 = vmatpush2.bf16.msra.mxu0 0
    %870 = vmatprep.subr.bf16.mxu0 0
    %871 = vmatpush2.bf16.msra.mxu0 0
    %872 = vmatprep.subr.bf16.mxu0 0
    %873 = vmatpush2.bf16.msra.mxu0 0
    %874 = vmatprep.subr.bf16.mxu0 0
    %875 = vmatpush2.bf16.msra.mxu0 0
    %876 = vmatprep.subr.bf16.mxu0 0
    %877 = vmatpush2.bf16.msra.mxu0 0
    %878 = vmatprep.subr.bf16.mxu0 0
    %879 = vmatpush2.bf16.msra.mxu0 0
    %880 = vmatprep.mubr.bf16.mxu0 0
    %881 = vmatmul.mubr.bf16.gmra.mxu0 %v776
    %v882 = vpop.f32.mrf.mxu0
    %v883 = vadd.f32 %v798, %v882
    %v884 = vpop.f32.mrf.mxu0
    %v885 = vpop.f32.mrf.mxu0
    %v886 = vpop.f32.mrf.mxu0
    %887 = vdwg.mxu0
    %v888 = vmax.f32 %v883, 0.0
    %v889 = vpack.c.bf16 %v888, %v888
    %v890 = vld [vmem:[%s5] sm:$0xf]
    %v891 = vld [vmem:[%s5 + $0x4] sm:$0xf]
    %v892 = vld [vmem:[%s5 + $0x8] sm:$0xf]
    %v893 = vld [vmem:[%s5 + $0xc] sm:$0xf]
    %v894 = vld [vmem:[%s5 + $0x10] sm:$0xf]
    %v895 = vld [vmem:[%s5 + $0x14] sm:$0xf]
    %v896 = vld [vmem:[%s5 + $0x18] sm:$0xf]
    %v897 = vld [vmem:[%s5 + $0x1c] sm:$0xf]
    %v898 = vld [vmem:[%s5 + $0x20] sm:$0xf]
    %v899 = vld [vmem:[%s5 + $0x24] sm:$0xf]
    %v900 = vld [vmem:[%s5 + $0x28] sm:$0xf]
    %v901 = vld [vmem:[%s5 + $0x2c] sm:$0xf]
    %v902 = vld [vmem:[%s5 + $0x30] sm:$0xf]
    %v903 = vld [vmem:[%s5 + $0x34] sm:$0xf]
    %v904 = vld [vmem:[%s5 + $0x38] sm:$0xf]
    %v905 = vld [vmem:[%s5 + $0x3c] sm:$0xf]
    %v906 = vld [vmem:[%s6] sm:$0x1]
    %v908 = vlaneseq
    %v909 = vshrl.u32 %v908, 7
    %v910 = vsub.s32 0, %v909
    %v911 = vrot.slane %v906, %v910
    %v929 = vunpack.c.l.b16 %v890
    %v930 = vunpack.c.l.b16 %v891
    %v931 = vunpack.c.l.b16 %v892
    %v932 = vunpack.c.l.b16 %v893
    %v933 = vunpack.c.l.b16 %v894
    %v934 = vunpack.c.l.b16 %v895
    %v935 = vunpack.c.l.b16 %v896
    %v936 = vunpack.c.l.b16 %v897
    %v937 = vunpack.c.l.b16 %v898
    %v938 = vunpack.c.l.b16 %v899
    %v939 = vunpack.c.l.b16 %v900
    %v940 = vunpack.c.l.b16 %v901
    %v941 = vunpack.c.l.b16 %v902
    %v942 = vunpack.c.l.b16 %v903
    %v943 = vunpack.c.l.b16 %v904
    %v944 = vunpack.c.l.b16 %v905
    %v945 = vpack.c.b16 %v930, %v929
    %v946 = vpack.c.b16 %v932, %v931
    %v947 = vpack.c.b16 %v934, %v933
    %v948 = vpack.c.b16 %v936, %v935
    %v949 = vpack.c.b16 %v938, %v937
    %v950 = vpack.c.b16 %v940, %v939
    %v951 = vpack.c.b16 %v942, %v941
    %v952 = vpack.c.b16 %v944, %v943
    %961 = vmatprep.subr.bf16.mxu0 0
    %962 = vmatpush1.bf16.msra.mxu0 %v952
    %963 = vmatprep.subr.bf16.mxu0 0
    %964 = vmatpush1.bf16.msra.mxu0 %v951
    %965 = vmatprep.subr.bf16.mxu0 0
    %966 = vmatpush1.bf16.msra.mxu0 %v950
    %967 = vmatprep.subr.bf16.mxu0 0
    %968 = vmatpush1.bf16.msra.mxu0 %v949
    %969 = vmatprep.subr.bf16.mxu0 0
    %970 = vmatpush1.bf16.msra.mxu0 %v948
    %971 = vmatprep.subr.bf16.mxu0 0
    %972 = vmatpush1.bf16.msra.mxu0 %v947
    %973 = vmatprep.subr.bf16.mxu0 0
    %974 = vmatpush1.bf16.msra.mxu0 %v946
    %975 = vmatprep.subr.bf16.mxu0 0
    %976 = vmatpush1.bf16.msra.mxu0 %v945
    %977 = vmatprep.subr.bf16.mxu0 0
    %978 = vmatpush2.bf16.msra.mxu0 0
    %979 = vmatprep.subr.bf16.mxu0 0
    %980 = vmatpush2.bf16.msra.mxu0 0
    %981 = vmatprep.subr.bf16.mxu0 0
    %982 = vmatpush2.bf16.msra.mxu0 0
    %983 = vmatprep.subr.bf16.mxu0 0
    %984 = vmatpush2.bf16.msra.mxu0 0
    %985 = vmatprep.subr.bf16.mxu0 0
    %986 = vmatpush2.bf16.msra.mxu0 0
    %987 = vmatprep.subr.bf16.mxu0 0
    %988 = vmatpush2.bf16.msra.mxu0 0
    %989 = vmatprep.subr.bf16.mxu0 0
    %990 = vmatpush2.bf16.msra.mxu0 0
    %991 = vmatprep.subr.bf16.mxu0 0
    %992 = vmatpush2.bf16.msra.mxu0 0
    %993 = vmatprep.mubr.bf16.mxu0 0
    %994 = vmatmul.mubr.bf16.gmra.mxu0 %v889
    %v995 = vpop.f32.mrf.mxu0
    %v996 = vadd.f32 %v911, %v995
    %v997 = vpop.f32.mrf.mxu0
    %v998 = vpop.f32.mrf.mxu0
    %v999 = vpop.f32.mrf.mxu0
    %1000 = vdwg.mxu0
    %1001 = vst [vmem:[#allocation5] sm:$0x3] %v996
    // Predicated region
    $region34: #{continual_model_forward.1} parent=1 // pred_check
      _
    $region35: #{continual_model_forward.1} parent=1 // pred_check_branch
      %1003 = sbr.rel (0) target = $region37
    $region36: #{continual_model_forward.1} parent=1 // pred_region
      %s1005 = ssub.s32 32, 32
      %1006 = vsyncadd [#allocation4], %s1005
      %s1008 = sshll.u32 [#allocation5], 4
      %s1009 = int_to_ptr.vmem [resolvable:$true] %s1008
      %1011 = dma.vmem_to_hbm [thread:$0]  %s1009, 32, %s7, [#allocation4]
    $region37: #{continual_model_forward.1} parent=1 // pred_fallthru
      _
    // Predicated region
    $region38: #{continual_model_forward.1} parent=1 // pred_check
      _
    $region39: #{continual_model_forward.1} parent=1 // pred_check_branch
      %1013 = sbr.rel (0) target = $region41
    $region40: #{continual_model_forward.1} parent=1 // pred_region
      %1014 = dma.done [#allocation4], 32
    $region41: #{continual_model_forward.1} parent=1 // pred_fallthru
      _
    %1015 = vsyncpa [#allocation3], 1
    %1016 = vsyncpa [#allocation4], 1

</llo_original>
